<compile_context>
chip_gen: v7x
topology: tpu7x:2x2x1
jax: 0.10.0
libtpu: 0.0.40
codegen_flags: <defaults>
</compile_context>

<pallas_src>
import jax
import jax.numpy as jnp
from jax import lax
from jax.experimental import pallas as pl
from jax.experimental.pallas import tpu as pltpu

EPS = 1e-5

_MAX_LANE_TILE = 32768        # cap lane width so large maps still form a grid
_MIN_GRID_STEPS = 8           # >= ~4 steps per TensorCore on v7x megacore
_MIN_BLOCK_BYTES = 512 * 1024 # don't shrink blocks below ~0.5 MiB of work


def _frozen_bn_kernel(x_ref, scale_ref, bias_ref, o_ref):
    # scale/bias blocks are (row_tile, 1) or (1, lane_tile) f32 and broadcast
    # against the (row_tile, lane_tile) x block; math in f32, cast on store.
    x = x_ref[...].astype(jnp.float32)
    o_ref[...] = (x * scale_ref[...] + bias_ref[...]).astype(o_ref.dtype)


def _round_down(x, m):
    return max(m, (x // m) * m)


def _vmem_capacity_bytes():
    try:
        cap = getattr(pltpu.get_tpu_info(), "vmem_capacity_bytes", None)
        if cap:
            return int(cap)
    except Exception:
        pass
    return 128 * 1024 * 1024  # v5e / v6e default


def _block_budget_bytes(vmem_cap):
    # v7x-class (64 MiB VMEM, ~3.2 TB/s HBM per TC): bigger blocks amortise
    # the ~0.35 us/step grid overhead; 2x(in+out) 10 MiB blocks still fit.
    if vmem_cap <= 64 * 1024 * 1024:
        return 10 * 1024 * 1024
    # v5e / v6e (128 MiB VMEM, slower HBM): ~6 MiB blocks sit on the roofline.
    return 6 * 1024 * 1024


def _pick_tiles(rows, cols, itemsize, budget_bytes):
    """Pick (row_tile, lane_tile) obeying packing/lane rules within budget."""
    sub = {4: 8, 2: 16, 1: 32}.get(itemsize, 8)     # native sublane packing
    budget_elems = max(sub * 128, budget_bytes // itemsize)

    # Lane (last) axis: 128-multiples (a partial last block is masked by
    # Pallas), or the full axis when narrower than one vreg row.
    if cols < 128:
        lane_tile = cols
    else:
        lane_cap = max(128, _round_down(budget_elems // sub, 128))
        lane_tile = min(_round_down(cols, 128), lane_cap, _MAX_LANE_TILE)

    # Sublane axis: multiple of the dtype's packing, or the full axis.
    max_rows = max(sub, _round_down(budget_elems // lane_tile, sub))
    row_tile = rows if rows <= max_rows else _round_down(max_rows, sub)

    # Guarantee enough grid steps for DMA/compute pipelining and megacore
    # sharding; shrink rows first (keeps the lane axis maximally dense) and
    # never below ~0.5-1 MiB of work per block.
    for _ in range(32):
        steps = pl.cdiv(rows, row_tile) * pl.cdiv(cols, lane_tile)
        if steps >= _MIN_GRID_STEPS:
            break
        if row_tile * lane_tile * itemsize <= 2 * _MIN_BLOCK_BYTES:
            break
        if row_tile > sub:
            row_tile = max(sub, _round_down(row_tile // 2, sub))
        elif lane_tile > 128:
            lane_tile = max(128, _round_down(lane_tile // 2, 128))
        else:
            break
    return row_tile, lane_tile


def frozen_batch_norm_2d(x_nchw, weight, bias, running_mean, running_var,
                         *, donate_x=False):
    """x_nchw: (N, C, H, W); params: (C,). Returns (N, C, H, W)."""
    N, C, H, W = x_nchw.shape
    hw, chw = H * W, C * H * W
    itemsize = x_nchw.dtype.itemsize

    # Fold the four frozen buffers once, in f32 (matches the PyTorch module).
    w = weight.astype(jnp.float32)
    b = bias.astype(jnp.float32)
    rm = running_mean.astype(jnp.float32)
    rv = running_var.astype(jnp.float32)
    scale_c = w * lax.rsqrt(rv + EPS)            # (C,)
    bias_c = b - rm * scale_c                    # (C,)

    # Pick the contiguous 2-D view (no transpose) whose lane axis is densest:
    #   row-fold : (N*C, H*W)  with (N*C, 1)   params   (big feature maps)
    #   lane-fold: (N, C*H*W)  with (1, C*H*W) params   (small/odd H*W, 7x7..)
    if hw % 128 == 0:
        row_fold = True
    elif chw % 128 == 0:
        row_fold = False
    else:
        row_fold = hw >= 128     # neither exact: keep the wider-usable view

    if row_fold:
        rows, cols = N * C, hw
        scale_p = jnp.tile(scale_c, N).reshape(rows, 1)
        bias_p = jnp.tile(bias_c, N).reshape(rows, 1)
    else:
        rows, cols = N, chw
        scale_p = jnp.repeat(scale_c, hw).reshape(1, cols)
        bias_p = jnp.repeat(bias_c, hw).reshape(1, cols)
    x2d = x_nchw.reshape(rows, cols)

    vmem_cap = _vmem_capacity_bytes()
    row_tile, lane_tile = _pick_tiles(rows, cols, itemsize,
                                      _block_budget_bytes(vmem_cap))
    grid = (pl.cdiv(rows, row_tile), pl.cdiv(cols, lane_tile))

    if row_fold:
        p_block, p_map = (row_tile, 1), (lambda i, j: (i, 0))
    else:
        p_block, p_map = (1, lane_tile), (lambda i, j: (0, j))

    # Scoped-VMEM limit from actual usage: double-buffered x in/out blocks +
    # double-buffered param blocks + slack.  Never below ~24 MiB (v5e's
    # 16 MiB scoped default is too small for these blocks), and always leave
    # headroom below the physical capacity.
    x_block_bytes = row_tile * lane_tile * itemsize
    p_block_bytes = p_block[0] * p_block[1] * 4
    vmem_limit = max(24 << 20, 4 * x_block_bytes + 4 * p_block_bytes + (4 << 20))
    vmem_limit = min(vmem_limit, (vmem_cap * 3) // 4)

    cost = pl.CostEstimate(
        flops=2 * rows * cols,
        transcendentals=0,
        bytes_accessed=2 * rows * cols * itemsize + 2 * scale_p.size * 4,
    )

    out2d = pl.pallas_call(
        _frozen_bn_kernel,
        out_shape=jax.ShapeDtypeStruct((rows, cols), x2d.dtype),
        grid_spec=pltpu.PrefetchScalarGridSpec(
            num_scalar_prefetch=0,
            grid=grid,
            in_specs=[
                pl.BlockSpec((row_tile, lane_tile), lambda i, j: (i, j)),
                pl.BlockSpec(p_block, p_map),
                pl.BlockSpec(p_block, p_map),
            ],
            out_specs=pl.BlockSpec((row_tile, lane_tile), lambda i, j: (i, j)),
        ),
        compiler_params=pltpu.CompilerParams(
            # Purely elementwise: both grid axes parallel so v7x megacore can
            # shard the grid across its two TensorCores (no-op on v5e/v6e).
            dimension_semantics=("parallel", "parallel"),
            vmem_limit_bytes=int(vmem_limit),
        ),
        cost_estimate=cost,
        # Inference-only frozen BN: optionally write the result in place of x
        # (saves one HBM allocation) when the caller will not reuse x.
        input_output_aliases=({0: 0} if donate_x else {}),
    )(x2d, scale_p, bias_p)

    return out2d.reshape(N, C, H, W)


if __name__ == "__main__":
    key = jax.random.PRNGKey(0)
    N, C, H, W = 2, 4, 16, 16
    kx, kw, kb, km, kv = jax.random.split(key, 5)

    x = jax.random.normal(kx, (N, C, H, W), dtype=jnp.float32)
    # Deterministic "frozen" parameters (shapes per __init__: all (C,)).
    weight = jnp.ones((C,), jnp.float32) + 0.1 * jax.random.normal(kw, (C,))
    bias = 0.1 * jax.random.normal(kb, (C,))
    running_mean = 0.1 * jax.random.normal(km, (C,))
    running_var = jnp.ones((C,), jnp.float32) + 0.1 * jnp.abs(
        jax.random.normal(kv, (C,)))

    y = frozen_batch_norm_2d(x, weight, bias, running_mean, running_var)
    y = jax.block_until_ready(y)

    # Pure-JAX reference matching the PyTorch forward exactly.
    w4 = weight.reshape(1, C, 1, 1)
    b4 = bias.reshape(1, C, 1, 1)
    rv4 = running_var.reshape(1, C, 1, 1)
    rm4 = running_mean.reshape(1, C, 1, 1)
    scale = w4 * lax.rsqrt(rv4 + EPS)
    ref = x * scale + (b4 - rm4 * scale)

    assert y.shape == x.shape and y.dtype == x.dtype
    assert jnp.allclose(y, ref, atol=1e-5, rtol=1e-5)
    print("KERNEL_OK")
</pallas_src>

<mosaic_0001>
module attributes {stable_mosaic.version = 11 : i64} {
  func.func @_frozen_bn_kernel(%arg0: i32, %arg1: i32, %arg2: memref<8x256xf32, #tpu.memory_space<vmem>>, %arg3: memref<8x1xf32, #tpu.memory_space<vmem>>, %arg4: memref<8x1xf32, #tpu.memory_space<vmem>>, %arg5: memref<8x256xf32, #tpu.memory_space<vmem>>) attributes {dimension_semantics = [#tpu.dimension_semantics<parallel>, #tpu.dimension_semantics<parallel>], iteration_bounds = array<i64: 1, 1>, scalar_prefetch = 0 : i64, scratch_operands = 0 : i64, tpu.core_type = #tpu.core_type<tc>, window_params = [{transform_indices = @transform_0, window_bounds = array<i64: 8, 256>}, {transform_indices = @transform_1, window_bounds = array<i64: 8, 1>}, {transform_indices = @transform_2, window_bounds = array<i64: 8, 1>}, {transform_indices = @transform_3, window_bounds = array<i64: 8, 256>}]} {
    %c0 = arith.constant 0 : index
    %c0_0 = arith.constant 0 : index
    %0 = vector.load %arg2[%c0, %c0_0] : memref<8x256xf32, #tpu.memory_space<vmem>>, vector<8x256xf32>
    %c0_1 = arith.constant 0 : index
    %c0_2 = arith.constant 0 : index
    %1 = vector.load %arg3[%c0_1, %c0_2] : memref<8x1xf32, #tpu.memory_space<vmem>>, vector<8x1xf32>
    %2 = vector.broadcast %1 : vector<8x1xf32> to vector<8x256xf32>
    %3 = arith.mulf %0, %2 : vector<8x256xf32>
    %c0_3 = arith.constant 0 : index
    %c0_4 = arith.constant 0 : index
    %4 = vector.load %arg4[%c0_3, %c0_4] : memref<8x1xf32, #tpu.memory_space<vmem>>, vector<8x1xf32>
    %5 = vector.broadcast %4 : vector<8x1xf32> to vector<8x256xf32>
    %6 = arith.addf %3, %5 : vector<8x256xf32>
    %c0_5 = arith.constant 0 : index
    %c0_6 = arith.constant 0 : index
    %7 = vector.load %arg5[%c0_5, %c0_6] : memref<8x256xf32, #tpu.memory_space<vmem>>, vector<8x256xf32>
    tpu.vector_store %arg5[%c0_5, %c0_6], %6 {strides = array<i32>} : memref<8x256xf32, #tpu.memory_space<vmem>>, vector<8x256xf32>,
    return
  }
  func.func @transform_0(%arg0: i32, %arg1: i32) -> (i32, i32) {
    %c0_i32 = arith.constant 0 : i32
    return %arg0, %arg1 : i32, i32
  }
  func.func @transform_1(%arg0: i32, %arg1: i32) -> (i32, i32) {
    %c0_i32 = arith.constant 0 : i32
    %c0_i32_0 = arith.constant 0 : i32
    return %arg0, %c0_i32 : i32, i32
  }
  func.func @transform_2(%arg0: i32, %arg1: i32) -> (i32, i32) {
    %c0_i32 = arith.constant 0 : i32
    %c0_i32_0 = arith.constant 0 : i32
    return %arg0, %c0_i32 : i32, i32
  }
  func.func @transform_3(%arg0: i32, %arg1: i32) -> (i32, i32) {
    %c0_i32 = arith.constant 0 : i32
    return %arg0, %arg1 : i32, i32
  }
}

</mosaic_0001>

<llo_original>
// kernel: tpu_custom_call.1
$region0: #{tpu_custom_call.1}
  #allocation0 [shape = 'u32[]', space=smem, size = 0x4, offset = 0x4, fixed_abs, tag = 'smem constant byte address 0x4 - core index']
  #allocation1 [shape = 'u32[144,128]{1,0:T(1,128)}', space=vmem, size = 0x12000, scoped, tag = 'internal scratch']
  %s0 = inlined_call_operand.vmem [shape: f32[8,256], index: 0, kind: input, shape index: {}]
  %s1 = inlined_call_operand.vmem [shape: f32[8,1], index: 1, kind: input, shape index: {}]
  %s2 = inlined_call_operand.vmem [shape: f32[8,1], index: 2, kind: input, shape index: {}]
  %s3 = inlined_call_operand.hbm [shape: f32[8,256], index: 3, kind: output, shape index: {}]
  %s4 = sld [smem:[#allocation0]]
  $region22: #{tpu_custom_call.1} parent=0
    _
  %s6 = ssub.s32 1, %s4
  %s7 = scalar_select 0, %s6, %s4
  $region1: #{tpu_custom_call.1} parent=0
    #allocation2 [shape = 'u8[8192]{0}', space=vmem, size = 0x2000, scoped, tag = 'output window, operand 0, single buffered']
    #allocation3 [shape = 's32[1]{0}', space=sflag, size = 0x4, scoped, tag = 'scoped memory for tpu_custom_call.1']
    %8 = vsyncpa [#allocation3], 0
    // Predicated region
    $region2: #{tpu_custom_call.1} parent=1 // pred_check
      _
    $region3: #{tpu_custom_call.1} parent=1 // pred_check_branch
      %10 = sbr.rel (0) target = $region5
    $region4: #{tpu_custom_call.1} parent=1 // pred_region
      _
    $region5: #{tpu_custom_call.1} parent=1 // pred_fallthru
      _
    // Predicated region
    $region6: #{tpu_custom_call.1} parent=1 // pred_check
      _
    $region7: #{tpu_custom_call.1} parent=1 // pred_check_branch
      %12 = sbr.rel (0) target = $region9
    $region8: #{tpu_custom_call.1} parent=1 // pred_region
      _
    $region9: #{tpu_custom_call.1} parent=1 // pred_fallthru
      _
    // Predicated region
    $region10: #{tpu_custom_call.1} parent=1 // pred_check
      _
    $region11: #{tpu_custom_call.1} parent=1 // pred_check_branch
      %14 = sbr.rel (0) target = $region13
    $region12: #{tpu_custom_call.1} parent=1 // pred_region
      _
    $region13: #{tpu_custom_call.1} parent=1 // pred_fallthru
      _
    %v15 = vld [vmem:[%s0] sm:$0xff]
    %v16 = vld [vmem:[%s0 + $0x8] sm:$0xff]
    %v17 = vld [vmem:[%s1] sm:$0xff]
    %19 = vset.pattern.permute.xlu0 0
    %20 = vperm.xlu0 %19, %v17
    %v21 = vpop.permute.xlu0 %20
    %v23 = vmul.f32 %v15, %v21
    %v24 = vmul.f32 %v16, %v21
    %v25 = vld [vmem:[%s2] sm:$0xff]
    %27 = vset.pattern.permute.xlu0 0
    %28 = vperm.xlu0 %27, %v25
    %v29 = vpop.permute.xlu0 %28
    %v31 = vadd.f32 %v23, %v29
    %v32 = vadd.f32 %v24, %v29
    %33 = vst [vmem:[#allocation2] sm:$0xff] %v31
    %34 = vst [vmem:[#allocation2 + $0x8] sm:$0xff] %v32
    // Predicated region
    $region14: #{tpu_custom_call.1} parent=1 // pred_check
      _
    $region15: #{tpu_custom_call.1} parent=1 // pred_check_branch
      %36 = sbr.rel (0) target = $region17
    $region16: #{tpu_custom_call.1} parent=1 // pred_region
      %s38 = ssub.s32 256, 256
      %39 = vsyncadd [#allocation3], %s38
      %s41 = sshll.u32 [#allocation2], 4
      %s42 = int_to_ptr.vmem [resolvable:$true] %s41
      %44 = dma.vmem_to_hbm [thread:$0]  %s42, 256, %s3, [#allocation3]
    $region17: #{tpu_custom_call.1} parent=1 // pred_fallthru
      _
    // Predicated region
    $region18: #{tpu_custom_call.1} parent=1 // pred_check
      _
    $region19: #{tpu_custom_call.1} parent=1 // pred_check_branch
      %46 = sbr.rel (0) target = $region21
    $region20: #{tpu_custom_call.1} parent=1 // pred_region
      %47 = dma.done [#allocation3], 256
    $region21: #{tpu_custom_call.1} parent=1 // pred_fallthru
      _
    %48 = vsyncpa [#allocation3], 1

</llo_original>
